<compile_context>
chip_gen: v7x
topology: tpu7x:2x2x1
jax: 0.10.0
libtpu: 0.0.40
codegen_flags: <defaults>
</compile_context>

<pallas_src>
import functools

import jax
import jax.numpy as jnp
from jax.experimental import pallas as pl
from jax.experimental.pallas import tpu as pltpu

EPS = 1e-6


def _round_up(a, b):
    return -(-a // b) * b


def _gem_freq_kernel_3d(p_ref, x_ref, o_ref, *, eps):
    """Blocks: x (tb, F, T) native dtype; out (tb, T) native dtype."""
    p = p_ref[0]                                      # learnable exponent (SMEM scalar)
    inv_p = 1.0 / p
    x = x_ref[...].astype(jnp.float32)                # cast in-register, no HBM f32 copy
    xp = jnp.exp(p * jnp.log(jnp.maximum(x, eps)))    # clamp(min=eps) ** p   (EUP, f32)
    m = jnp.mean(xp, axis=1)                          # (tb, T): mean over frequency
    o_ref[...] = jnp.exp(inv_p * jnp.log(m)).astype(o_ref.dtype)   # m ** (1/p)


def _gem_freq_kernel_lanedense(p_ref, x_ref, red_ref, o_ref, *, eps):
    """Blocks: x (tb, F*T) native dtype (lane-dense); red (F*T, T) f32; out (tb, T)."""
    p = p_ref[0]
    inv_p = 1.0 / p
    x = x_ref[...].astype(jnp.float32)                # full 128-lane vreg utilization
    xp = jnp.exp(p * jnp.log(jnp.maximum(x, eps)))
    # Frequency mean as a matmul with the 0 / (1/F) selection matrix: runs on the idle MXU,
    # avoids any in-kernel reshape/relayout.  HIGHEST precision keeps a true f32 reduction.
    m = jnp.dot(xp, red_ref[...], preferred_element_type=jnp.float32,
                precision=jax.lax.Precision.HIGHEST)  # (tb, T)
    o_ref[...] = jnp.exp(inv_p * jnp.log(m)).astype(o_ref.dtype)


def _pick_row_tile(rows, f, t, dtype, lane_dense, budget_bytes=12 * 1024 * 1024):
    """Row-tile size budgeted against the PADDED VMEM footprint (incl. double-buffering)."""
    isz = jnp.dtype(dtype).itemsize
    sub = 8 * max(1, 4 // isz)                        # sublane granularity (dtype packing)
    t_pad = _round_up(t, 128)
    budget = budget_bytes
    if lane_dense:
        in_row = _round_up(f * t, 128) * isz                  # (tb, F*T) input block
        budget -= 2 * _round_up(f * t, 8) * t_pad * 4         # resident f32 reduction matrix
    else:
        in_row = _round_up(f, sub) * t_pad * isz              # (tb, F, T) input block
    per_row = 2 * (in_row + t_pad * isz)                      # x2: BlockSpec double-buffers
    tb = max(1, budget // per_row)
    if rows > 8:
        tb = min(tb, _round_up(pl.cdiv(rows, 2), 8))          # >= 2 grid steps (v7x megacore)
    if rows < 8:
        return rows                                           # full-extent block is allowed
    align = sub if rows >= sub else 8
    return max(align, (min(tb, rows) // align) * align)       # multiple of 8 (or 16/32 packed)


def gem_freq(x, p, eps=EPS):
    """Pallas TPU forward of GeMFreq.  x: (B, C, F, T) float; p: shape-(1,) parameter."""
    B, C, F, T = x.shape
    rows = B * C
    ft = F * T
    p_arr = jnp.asarray(p, jnp.float32).reshape(1)

    # Lane-dense path: narrow T, with F*T 128-aligned and small enough that the reduction
    # matrix stays tiny.  Anything else falls back to the general (tb, F, T) path.
    lane_dense = (T < 128) and (ft % 128 == 0) and (ft <= 4096)

    tb = _pick_row_tile(rows, F, T, x.dtype, lane_dense)
    grid = (pl.cdiv(rows, tb),)                       # ragged last block is fine (per-row math)
    cparams = pltpu.CompilerParams(dimension_semantics=("parallel",))
    out_sd = jax.ShapeDtypeStruct((rows, T), x.dtype)
    smem_p = pl.BlockSpec(memory_space=pltpu.MemorySpace.SMEM)

    if lane_dense:
        x2 = x.reshape(rows, ft)                      # free contiguous view, native dtype
        # red[i, t] = 1/F if (i % T) == t else 0  ->  xp @ red == mean over frequency.
        i_idx = jnp.arange(ft, dtype=jnp.int32)[:, None]
        t_idx = jnp.arange(T, dtype=jnp.int32)[None, :]
        red = jnp.where((i_idx % T) == t_idx, 1.0 / F, 0.0).astype(jnp.float32)
        out = pl.pallas_call(
            functools.partial(_gem_freq_kernel_lanedense, eps=float(eps)),
            out_shape=out_sd,
            grid=grid,
            in_specs=[
                smem_p,                                          # p (SMEM scalar)
                pl.BlockSpec((tb, ft), lambda i: (i, 0)),        # lane-dense row tile
                pl.BlockSpec((ft, T), lambda i: (0, 0)),         # reduction matrix (resident)
            ],
            out_specs=pl.BlockSpec((tb, T), lambda i: (i, 0)),
            compiler_params=cparams,
        )(p_arr, x2, red)
    else:
        x2 = x.reshape(rows, F, T)                    # free contiguous view, native dtype
        out = pl.pallas_call(
            functools.partial(_gem_freq_kernel_3d, eps=float(eps)),
            out_shape=out_sd,
            grid=grid,
            in_specs=[
                smem_p,
                pl.BlockSpec((tb, F, T), lambda i: (i, 0, 0)),
            ],
            out_specs=pl.BlockSpec((tb, T), lambda i: (i, 0)),
            compiler_params=cparams,
        )(p_arr, x2)

    return out.reshape(B, C, 1, T)


if __name__ == "__main__":
    key = jax.random.PRNGKey(0)
    k1, k2, k3, k4 = jax.random.split(key, 4)
    p = jnp.ones((1,), jnp.float32) * 3.0             # nn.Parameter(torch.ones(1) * 3)

    def reference(x, p, eps=EPS):
        xf = x.astype(jnp.float32)
        m = jnp.mean(jnp.maximum(xf, eps) ** p[0], axis=2, keepdims=True)
        return (m ** (1.0 / p[0])).astype(x.dtype)

    def check(x, rtol, atol):
        out = jax.block_until_ready(gem_freq(x, p))
        ref = reference(x, p)
        B, C, _, T = x.shape
        assert out.shape == (B, C, 1, T), out.shape
        assert out.dtype == x.dtype, out.dtype
        of, rf = out.astype(jnp.float32), ref.astype(jnp.float32)
        assert bool(jnp.all(jnp.isfinite(of)))
        assert bool(jnp.allclose(of, rf, rtol=rtol, atol=atol)), \
            float(jnp.max(jnp.abs(of - rf)))

    # 1) f32, narrow T           -> lane-dense MXU-reduction path, single block.
    check(jax.random.normal(k1, (2, 4, 16, 16), jnp.float32), rtol=1e-4, atol=1e-5)
    # 2) bf16, lane-aligned T    -> 3-D mean path, native bf16 in/out (no wrapper casts).
    check(jax.random.normal(k2, (2, 4, 16, 128), jnp.bfloat16), rtol=2e-2, atol=2e-2)
    # 3) ragged rows + narrow T  -> lane-dense path, 2-step grid, partial last block.
    check(jax.random.normal(k3, (3, 5, 16, 24), jnp.float32), rtol=1e-4, atol=1e-5)
    # 4) ragged rows + unaligned F/T -> 3-D path with padded block dims.
    check(jax.random.normal(k4, (3, 5, 12, 130), jnp.float32), rtol=1e-4, atol=1e-5)

    print("KERNEL_OK")
</pallas_src>

<mosaic_0001>
module attributes {stable_mosaic.version = 11 : i64} {
  func.func @_gem_freq_kernel_lanedense(%arg0: i32, %arg1: memref<1xf32, #tpu.memory_space<smem>>, %arg2: memref<8x256xf32, #tpu.memory_space<vmem>>, %arg3: memref<256x16xf32, #tpu.memory_space<vmem>>, %arg4: memref<8x16xf32, #tpu.memory_space<vmem>>) attributes {dimension_semantics = [#tpu.dimension_semantics<parallel>], iteration_bounds = array<i64: 1>, scalar_prefetch = 0 : i64, scratch_operands = 0 : i64, tpu.core_type = #tpu.core_type<tc>, window_params = [{transform_indices = @transform_0, window_bounds = array<i64: 1>}, {transform_indices = @transform_1, window_bounds = array<i64: 8, 256>}, {pipeline_mode = #tpu.pipeline_mode<synchronous>, transform_indices = @transform_2, window_bounds = array<i64: 256, 16>}, {transform_indices = @transform_3, window_bounds = array<i64: 8, 16>}]} {
    %c0 = arith.constant 0 : index
    %0 = memref.load %arg1[%c0] : memref<1xf32, #tpu.memory_space<smem>>
    %cst = arith.constant 1.000000e+00 : f32
    %1 = arith.divf %cst, %0 : f32
    %c0_0 = arith.constant 0 : index
    %c0_1 = arith.constant 0 : index
    %2 = vector.load %arg2[%c0_0, %c0_1] : memref<8x256xf32, #tpu.memory_space<vmem>>, vector<8x256xf32>
    %cst_2 = arith.constant 9.99999997E-7 : f32
    %3 = vector.broadcast %cst_2 : f32 to vector<8x256xf32>
    %4 = arith.maximumf %2, %3 : vector<8x256xf32>
    %5 = math.log %4 : vector<8x256xf32>
    %6 = vector.broadcast %0 : f32 to vector<8x256xf32>
    %7 = arith.mulf %6, %5 : vector<8x256xf32>
    %8 = math.exp %7 : vector<8x256xf32>
    %c0_3 = arith.constant 0 : index
    %c0_4 = arith.constant 0 : index
    %9 = vector.load %arg3[%c0_3, %c0_4] : memref<256x16xf32, #tpu.memory_space<vmem>>, vector<256x16xf32>
    %cst_5 = arith.constant dense<0.000000e+00> : vector<8x16xf32>
    %10 = tpu.matmul %8, %9, %cst_5 {dimension_numbers = #tpu.dot_dimension_numbers<[1], [0], [0], [1], [0, 0, 1, 1], [], []>, precision = #tpu.contract_precision<fp32>} : vector<8x256xf32>, vector<256x16xf32>, vector<8x16xf32> -> vector<8x16xf32>
    %11 = math.log %10 : vector<8x16xf32>
    %12 = vector.broadcast %1 : f32 to vector<8x16xf32>
    %13 = arith.mulf %12, %11 : vector<8x16xf32>
    %14 = math.exp %13 : vector<8x16xf32>
    %c0_6 = arith.constant 0 : index
    %c0_7 = arith.constant 0 : index
    %15 = vector.load %arg4[%c0_6, %c0_7] : memref<8x16xf32, #tpu.memory_space<vmem>>, vector<8x16xf32>
    tpu.vector_store %arg4[%c0_6, %c0_7], %14 {strides = array<i32>} : memref<8x16xf32, #tpu.memory_space<vmem>>, vector<8x16xf32>,
    return
  }
  func.func @transform_0(%arg0: i32) -> i32 {
    %c0_i32 = arith.constant 0 : i32
    %c0_i32_0 = arith.constant 0 : i32
    return %c0_i32 : i32
  }
  func.func @transform_1(%arg0: i32) -> (i32, i32) {
    %c0_i32 = arith.constant 0 : i32
    %c0_i32_0 = arith.constant 0 : i32
    return %arg0, %c0_i32 : i32, i32
  }
  func.func @transform_2(%arg0: i32) -> (i32, i32) {
    %c0_i32 = arith.constant 0 : i32
    %c0_i32_0 = arith.constant 0 : i32
    %c0_i32_1 = arith.constant 0 : i32
    return %c0_i32, %c0_i32_0 : i32, i32
  }
  func.func @transform_3(%arg0: i32) -> (i32, i32) {
    %c0_i32 = arith.constant 0 : i32
    %c0_i32_0 = arith.constant 0 : i32
    return %arg0, %c0_i32 : i32, i32
  }
}

</mosaic_0001>

<llo_original>
// kernel: tpu_custom_call.1
$region0: #{tpu_custom_call.1}
  #allocation0 [shape = 'u32[]', space=smem, size = 0x4, offset = 0x4, fixed_abs, tag = 'smem constant byte address 0x4 - core index']
  #allocation1 [shape = 'u32[144,128]{1,0:T(1,128)}', space=vmem, size = 0x12000, scoped, tag = 'internal scratch']
  #allocation2 [shape = 'f32[1]{0:T(128)S(6)}', space=smem, size = 0x200, scoped, tag = 'scoped memory for tpu_custom_call.1']
  %s0 = inlined_call_operand.<no memory space> [shape: f32[1], index: 0, kind: input, shape index: {}]
  %s1 = inlined_call_operand.vmem [shape: f32[8,256], index: 1, kind: input, shape index: {}]
  %s2 = inlined_call_operand.vmem [shape: f32[256,16], index: 2, kind: input, shape index: {}]
  %s3 = inlined_call_operand.hbm [shape: f32[8,16], index: 3, kind: output, shape index: {}]
  %s4 = sld [smem:[#allocation0]]
  $region22: #{tpu_custom_call.1} parent=0
    _
  %s6 = ssub.s32 1, %s4
  %s7 = scalar_select 0, %s6, %s4
  %8 = sst [smem:[#allocation2]] %s0
  $region1: #{tpu_custom_call.1} parent=0
    #allocation3 [shape = 'u8[4096]{0}', space=vmem, size = 0x1000, scoped, tag = 'output window, operand 0, single buffered']
    #allocation4 [shape = 's32[1]{0}', space=sflag, size = 0x4, scoped, tag = 'scoped memory for tpu_custom_call.1']
    %9 = vsyncpa [#allocation4], 0
    // Predicated region
    $region2: #{tpu_custom_call.1} parent=1 // pred_check
      _
    $region3: #{tpu_custom_call.1} parent=1 // pred_check_branch
      %11 = sbr.rel (0) target = $region5
    $region4: #{tpu_custom_call.1} parent=1 // pred_region
      _
    $region5: #{tpu_custom_call.1} parent=1 // pred_fallthru
      _
    // Predicated region
    $region6: #{tpu_custom_call.1} parent=1 // pred_check
      _
    $region7: #{tpu_custom_call.1} parent=1 // pred_check_branch
      %13 = sbr.rel (0) target = $region9
    $region8: #{tpu_custom_call.1} parent=1 // pred_region
      _
    $region9: #{tpu_custom_call.1} parent=1 // pred_fallthru
      _
    // Predicated region
    $region10: #{tpu_custom_call.1} parent=1 // pred_check
      _
    $region11: #{tpu_custom_call.1} parent=1 // pred_check_branch
      %15 = sbr.rel (0) target = $region13
    $region12: #{tpu_custom_call.1} parent=1 // pred_region
      _
    $region13: #{tpu_custom_call.1} parent=1 // pred_fallthru
      _
    %s16 = sld [smem:[#allocation2]]
    %v17 = vstv %s16
    %v18 = vrcp.pop %v17
    %s19 = vtos %v18
    %v20 = vld [vmem:[%s1] sm:$0xff]
    %v21 = vld [vmem:[%s1 + $0x8] sm:$0xff]
    %v22 = vmax.f32 %v20, 1e-06
    %v23 = vmax.f32 %v21, 1e-06
    %v24 = vlog2.pop %v22
    %v25 = vmul.f32 %v24, 0.6931472
    %v26 = vlog2.pop %v23
    %v27 = vmul.f32 %v26, 0.6931472
    %v28 = vstv %s16
    %v29 = vmul.f32 %v28, %v25
    %v30 = vmul.f32 %v28, %v27
    %v31 = vmul.f32 %v29, 1.442695
    %v32 = vpow.pop %v31
    %v33 = vmul.f32 %v30, 1.442695
    %v34 = vpow.pop %v33
    %v35 = vld [vmem:[%s2] sm:$0xff]
    %v36 = vld [vmem:[%s2 + $0x8] sm:$0xff]
    %v37 = vld [vmem:[%s2 + $0x10] sm:$0xff]
    %v38 = vld [vmem:[%s2 + $0x18] sm:$0xff]
    %v39 = vld [vmem:[%s2 + $0x20] sm:$0xff]
    %v40 = vld [vmem:[%s2 + $0x28] sm:$0xff]
    %v41 = vld [vmem:[%s2 + $0x30] sm:$0xff]
    %v42 = vld [vmem:[%s2 + $0x38] sm:$0xff]
    %v43 = vld [vmem:[%s2 + $0x40] sm:$0xff]
    %v44 = vld [vmem:[%s2 + $0x48] sm:$0xff]
    %v45 = vld [vmem:[%s2 + $0x50] sm:$0xff]
    %v46 = vld [vmem:[%s2 + $0x58] sm:$0xff]
    %v47 = vld [vmem:[%s2 + $0x60] sm:$0xff]
    %v48 = vld [vmem:[%s2 + $0x68] sm:$0xff]
    %v49 = vld [vmem:[%s2 + $0x70] sm:$0xff]
    %v50 = vld [vmem:[%s2 + $0x78] sm:$0xff]
    %v51 = vld [vmem:[%s2 + $0x80] sm:$0xff]
    %v52 = vld [vmem:[%s2 + $0x88] sm:$0xff]
    %v53 = vld [vmem:[%s2 + $0x90] sm:$0xff]
    %v54 = vld [vmem:[%s2 + $0x98] sm:$0xff]
    %v55 = vld [vmem:[%s2 + $0xa0] sm:$0xff]
    %v56 = vld [vmem:[%s2 + $0xa8] sm:$0xff]
    %v57 = vld [vmem:[%s2 + $0xb0] sm:$0xff]
    %v58 = vld [vmem:[%s2 + $0xb8] sm:$0xff]
    %v59 = vld [vmem:[%s2 + $0xc0] sm:$0xff]
    %v60 = vld [vmem:[%s2 + $0xc8] sm:$0xff]
    %v61 = vld [vmem:[%s2 + $0xd0] sm:$0xff]
    %v62 = vld [vmem:[%s2 + $0xd8] sm:$0xff]
    %v63 = vld [vmem:[%s2 + $0xe0] sm:$0xff]
    %v64 = vld [vmem:[%s2 + $0xe8] sm:$0xff]
    %v65 = vld [vmem:[%s2 + $0xf0] sm:$0xff]
    %v66 = vld [vmem:[%s2 + $0xf8] sm:$0xff]
    %67 = vmatprep.subr.mxu0 0.0
    %v68 = vand.u32 %v35, 4294901760
    %69 = vmatpush1.msra.mxu0 %v68
    %70 = vmatprep.subr.mxu0 0.0
    %v71 = vand.u32 %v36, 4294901760
    %72 = vmatpush1.msra.mxu0 %v71
    %73 = vmatprep.subr.mxu0 0.0
    %v74 = vand.u32 %v37, 4294901760
    %75 = vmatpush1.msra.mxu0 %v74
    %76 = vmatprep.subr.mxu0 0.0
    %v77 = vand.u32 %v38, 4294901760
    %78 = vmatpush1.msra.mxu0 %v77
    %79 = vmatprep.subr.mxu0 0.0
    %v80 = vand.u32 %v39, 4294901760
    %81 = vmatpush1.msra.mxu0 %v80
    %82 = vmatprep.subr.mxu0 0.0
    %v83 = vand.u32 %v40, 4294901760
    %84 = vmatpush1.msra.mxu0 %v83
    %85 = vmatprep.subr.mxu0 0.0
    %v86 = vand.u32 %v41, 4294901760
    %87 = vmatpush1.msra.mxu0 %v86
    %88 = vmatprep.subr.mxu0 0.0
    %v89 = vand.u32 %v42, 4294901760
    %90 = vmatpush1.msra.mxu0 %v89
    %91 = vmatprep.subr.mxu0 0.0
    %v92 = vand.u32 %v43, 4294901760
    %93 = vmatpush1.msra.mxu0 %v92
    %94 = vmatprep.subr.mxu0 0.0
    %v95 = vand.u32 %v44, 4294901760
    %96 = vmatpush1.msra.mxu0 %v95
    %97 = vmatprep.subr.mxu0 0.0
    %v98 = vand.u32 %v45, 4294901760
    %99 = vmatpush1.msra.mxu0 %v98
    %100 = vmatprep.subr.mxu0 0.0
    %v101 = vand.u32 %v46, 4294901760
    %102 = vmatpush1.msra.mxu0 %v101
    %103 = vmatprep.subr.mxu0 0.0
    %v104 = vand.u32 %v47, 4294901760
    %105 = vmatpush1.msra.mxu0 %v104
    %106 = vmatprep.subr.mxu0 0.0
    %v107 = vand.u32 %v48, 4294901760
    %108 = vmatpush1.msra.mxu0 %v107
    %109 = vmatprep.subr.mxu0 0.0
    %v110 = vand.u32 %v49, 4294901760
    %111 = vmatpush1.msra.mxu0 %v110
    %112 = vmatprep.subr.mxu0 0.0
    %v113 = vand.u32 %v50, 4294901760
    %114 = vmatpush1.msra.mxu0 %v113
    %115 = vmatprep.subr.mxu0 0.0
    %v116 = vand.u32 %v51, 4294901760
    %117 = vmatpush1.msra.mxu0 %v116
    %118 = vmatprep.subr.mxu0 0.0
    %v119 = vand.u32 %v52, 4294901760
    %120 = vmatpush1.msra.mxu0 %v119
    %121 = vmatprep.subr.mxu0 0.0
    %v122 = vand.u32 %v53, 4294901760
    %123 = vmatpush1.msra.mxu0 %v122
    %124 = vmatprep.subr.mxu0 0.0
    %v125 = vand.u32 %v54, 4294901760
    %126 = vmatpush1.msra.mxu0 %v125
    %127 = vmatprep.subr.mxu0 0.0
    %v128 = vand.u32 %v55, 4294901760
    %129 = vmatpush1.msra.mxu0 %v128
    %130 = vmatprep.subr.mxu0 0.0
    %v131 = vand.u32 %v56, 4294901760
    %132 = vmatpush1.msra.mxu0 %v131
    %133 = vmatprep.subr.mxu0 0.0
    %v134 = vand.u32 %v57, 4294901760
    %135 = vmatpush1.msra.mxu0 %v134
    %136 = vmatprep.subr.mxu0 0.0
    %v137 = vand.u32 %v58, 4294901760
    %138 = vmatpush1.msra.mxu0 %v137
    %139 = vmatprep.subr.mxu0 0.0
    %v140 = vand.u32 %v59, 4294901760
    %141 = vmatpush1.msra.mxu0 %v140
    %142 = vmatprep.subr.mxu0 0.0
    %v143 = vand.u32 %v60, 4294901760
    %144 = vmatpush1.msra.mxu0 %v143
    %145 = vmatprep.subr.mxu0 0.0
    %v146 = vand.u32 %v61, 4294901760
    %147 = vmatpush1.msra.mxu0 %v146
    %148 = vmatprep.subr.mxu0 0.0
    %v149 = vand.u32 %v62, 4294901760
    %150 = vmatpush1.msra.mxu0 %v149
    %151 = vmatprep.subr.mxu0 0.0
    %v152 = vand.u32 %v63, 4294901760
    %153 = vmatpush1.msra.mxu0 %v152
    %154 = vmatprep.subr.mxu0 0.0
    %v155 = vand.u32 %v64, 4294901760
    %156 = vmatpush1.msra.mxu0 %v155
    %157 = vmatprep.subr.mxu0 0.0
    %v158 = vand.u32 %v65, 4294901760
    %159 = vmatpush1.msra.mxu0 %v158
    %160 = vmatprep.subr.mxu0 0.0
    %v161 = vand.u32 %v66, 4294901760
    %162 = vmatpush1.msra.mxu0 %v161
    %v163 = vand.u32 %v34, 4294901760
    %v164 = vsub.f32 %v34, %v163
    %v165 = vand.u32 %v164, 4294901760
    %v166 = vsub.f32 %v164, %v165
    %v167 = vand.u32 %v166, 4294901760
    %168 = vmatprep.mubr.f32.mxu0 %v167
    %v169 = vand.u32 %v32, 4294901760
    %v170 = vsub.f32 %v32, %v169
    %v171 = vand.u32 %v170, 4294901760
    %v172 = vsub.f32 %v170, %v171
    %v173 = vand.u32 %v172, 4294901760
    %174 = vmatmul.mubr.f32.gmra.mrb[0].mxu0 %v173
    %v175 = vpop.f32.mrb[0].mxu0
    %v176 = vadd.f32 0.0, %v175
    %v177 = vpop.f32.mrb[0].mxu0
    %178 = vdwg.mxu0
    %179 = vmatprep.subr.mxu0 0.0
    %v180 = vand.u32 %v35, 4294901760
    %v181 = vsub.f32 %v35, %v180
    %v182 = vand.u32 %v181, 4294901760
    %v183 = vsub.f32 %v181, %v182
    %v184 = vand.u32 %v183, 4294901760
    %185 = vmatpush1.msra.mxu0 %v184
    %186 = vmatprep.subr.mxu0 0.0
    %v187 = vand.u32 %v36, 4294901760
    %v188 = vsub.f32 %v36, %v187
    %v189 = vand.u32 %v188, 4294901760
    %v190 = vsub.f32 %v188, %v189
    %v191 = vand.u32 %v190, 4294901760
    %192 = vmatpush1.msra.mxu0 %v191
    %193 = vmatprep.subr.mxu0 0.0
    %v194 = vand.u32 %v37, 4294901760
    %v195 = vsub.f32 %v37, %v194
    %v196 = vand.u32 %v195, 4294901760
    %v197 = vsub.f32 %v195, %v196
    %v198 = vand.u32 %v197, 4294901760
    %199 = vmatpush1.msra.mxu0 %v198
    %200 = vmatprep.subr.mxu0 0.0
    %v201 = vand.u32 %v38, 4294901760
    %v202 = vsub.f32 %v38, %v201
    %v203 = vand.u32 %v202, 4294901760
    %v204 = vsub.f32 %v202, %v203
    %v205 = vand.u32 %v204, 4294901760
    %206 = vmatpush1.msra.mxu0 %v205
    %207 = vmatprep.subr.mxu0 0.0
    %v208 = vand.u32 %v39, 4294901760
    %v209 = vsub.f32 %v39, %v208
    %v210 = vand.u32 %v209, 4294901760
    %v211 = vsub.f32 %v209, %v210
    %v212 = vand.u32 %v211, 4294901760
    %213 = vmatpush1.msra.mxu0 %v212
    %214 = vmatprep.subr.mxu0 0.0
    %v215 = vand.u32 %v40, 4294901760
    %v216 = vsub.f32 %v40, %v215
    %v217 = vand.u32 %v216, 4294901760
    %v218 = vsub.f32 %v216, %v217
    %v219 = vand.u32 %v218, 4294901760
    %220 = vmatpush1.msra.mxu0 %v219
    %221 = vmatprep.subr.mxu0 0.0
    %v222 = vand.u32 %v41, 4294901760
    %v223 = vsub.f32 %v41, %v222
    %v224 = vand.u32 %v223, 4294901760
    %v225 = vsub.f32 %v223, %v224
    %v226 = vand.u32 %v225, 4294901760
    %227 = vmatpush1.msra.mxu0 %v226
    %228 = vmatprep.subr.mxu0 0.0
    %v229 = vand.u32 %v42, 4294901760
    %v230 = vsub.f32 %v42, %v229
    %v231 = vand.u32 %v230, 4294901760
    %v232 = vsub.f32 %v230, %v231
    %v233 = vand.u32 %v232, 4294901760
    %234 = vmatpush1.msra.mxu0 %v233
    %235 = vmatprep.subr.mxu0 0.0
    %v236 = vand.u32 %v43, 4294901760
    %v237 = vsub.f32 %v43, %v236
    %v238 = vand.u32 %v237, 4294901760
    %v239 = vsub.f32 %v237, %v238
    %v240 = vand.u32 %v239, 4294901760
    %241 = vmatpush1.msra.mxu0 %v240
    %242 = vmatprep.subr.mxu0 0.0
    %v243 = vand.u32 %v44, 4294901760
    %v244 = vsub.f32 %v44, %v243
    %v245 = vand.u32 %v244, 4294901760
    %v246 = vsub.f32 %v244, %v245
    %v247 = vand.u32 %v246, 4294901760
    %248 = vmatpush1.msra.mxu0 %v247
    %249 = vmatprep.subr.mxu0 0.0
    %v250 = vand.u32 %v45, 4294901760
    %v251 = vsub.f32 %v45, %v250
    %v252 = vand.u32 %v251, 4294901760
    %v253 = vsub.f32 %v251, %v252
    %v254 = vand.u32 %v253, 4294901760
    %255 = vmatpush1.msra.mxu0 %v254
    %256 = vmatprep.subr.mxu0 0.0
    %v257 = vand.u32 %v46, 4294901760
    %v258 = vsub.f32 %v46, %v257
    %v259 = vand.u32 %v258, 4294901760
    %v260 = vsub.f32 %v258, %v259
    %v261 = vand.u32 %v260, 4294901760
    %262 = vmatpush1.msra.mxu0 %v261
    %263 = vmatprep.subr.mxu0 0.0
    %v264 = vand.u32 %v47, 4294901760
    %v265 = vsub.f32 %v47, %v264
    %v266 = vand.u32 %v265, 4294901760
    %v267 = vsub.f32 %v265, %v266
    %v268 = vand.u32 %v267, 4294901760
    %269 = vmatpush1.msra.mxu0 %v268
    %270 = vmatprep.subr.mxu0 0.0
    %v271 = vand.u32 %v48, 4294901760
    %v272 = vsub.f32 %v48, %v271
    %v273 = vand.u32 %v272, 4294901760
    %v274 = vsub.f32 %v272, %v273
    %v275 = vand.u32 %v274, 4294901760
    %276 = vmatpush1.msra.mxu0 %v275
    %277 = vmatprep.subr.mxu0 0.0
    %v278 = vand.u32 %v49, 4294901760
    %v279 = vsub.f32 %v49, %v278
    %v280 = vand.u32 %v279, 4294901760
    %v281 = vsub.f32 %v279, %v280
    %v282 = vand.u32 %v281, 4294901760
    %283 = vmatpush1.msra.mxu0 %v282
    %284 = vmatprep.subr.mxu0 0.0
    %v285 = vand.u32 %v50, 4294901760
    %v286 = vsub.f32 %v50, %v285
    %v287 = vand.u32 %v286, 4294901760
    %v288 = vsub.f32 %v286, %v287
    %v289 = vand.u32 %v288, 4294901760
    %290 = vmatpush1.msra.mxu0 %v289
    %291 = vmatprep.subr.mxu0 0.0
    %v292 = vand.u32 %v51, 4294901760
    %v293 = vsub.f32 %v51, %v292
    %v294 = vand.u32 %v293, 4294901760
    %v295 = vsub.f32 %v293, %v294
    %v296 = vand.u32 %v295, 4294901760
    %297 = vmatpush1.msra.mxu0 %v296
    %298 = vmatprep.subr.mxu0 0.0
    %v299 = vand.u32 %v52, 4294901760
    %v300 = vsub.f32 %v52, %v299
    %v301 = vand.u32 %v300, 4294901760
    %v302 = vsub.f32 %v300, %v301
    %v303 = vand.u32 %v302, 4294901760
    %304 = vmatpush1.msra.mxu0 %v303
    %305 = vmatprep.subr.mxu0 0.0
    %v306 = vand.u32 %v53, 4294901760
    %v307 = vsub.f32 %v53, %v306
    %v308 = vand.u32 %v307, 4294901760
    %v309 = vsub.f32 %v307, %v308
    %v310 = vand.u32 %v309, 4294901760
    %311 = vmatpush1.msra.mxu0 %v310
    %312 = vmatprep.subr.mxu0 0.0
    %v313 = vand.u32 %v54, 4294901760
    %v314 = vsub.f32 %v54, %v313
    %v315 = vand.u32 %v314, 4294901760
    %v316 = vsub.f32 %v314, %v315
    %v317 = vand.u32 %v316, 4294901760
    %318 = vmatpush1.msra.mxu0 %v317
    %319 = vmatprep.subr.mxu0 0.0
    %v320 = vand.u32 %v55, 4294901760
    %v321 = vsub.f32 %v55, %v320
    %v322 = vand.u32 %v321, 4294901760
    %v323 = vsub.f32 %v321, %v322
    %v324 = vand.u32 %v323, 4294901760
    %325 = vmatpush1.msra.mxu0 %v324
    %326 = vmatprep.subr.mxu0 0.0
    %v327 = vand.u32 %v56, 4294901760
    %v328 = vsub.f32 %v56, %v327
    %v329 = vand.u32 %v328, 4294901760
    %v330 = vsub.f32 %v328, %v329
    %v331 = vand.u32 %v330, 4294901760
    %332 = vmatpush1.msra.mxu0 %v331
    %333 = vmatprep.subr.mxu0 0.0
    %v334 = vand.u32 %v57, 4294901760
    %v335 = vsub.f32 %v57, %v334
    %v336 = vand.u32 %v335, 4294901760
    %v337 = vsub.f32 %v335, %v336
    %v338 = vand.u32 %v337, 4294901760
    %339 = vmatpush1.msra.mxu0 %v338
    %340 = vmatprep.subr.mxu0 0.0
    %v341 = vand.u32 %v58, 4294901760
    %v342 = vsub.f32 %v58, %v341
    %v343 = vand.u32 %v342, 4294901760
    %v344 = vsub.f32 %v342, %v343
    %v345 = vand.u32 %v344, 4294901760
    %346 = vmatpush1.msra.mxu0 %v345
    %347 = vmatprep.subr.mxu0 0.0
    %v348 = vand.u32 %v59, 4294901760
    %v349 = vsub.f32 %v59, %v348
    %v350 = vand.u32 %v349, 4294901760
    %v351 = vsub.f32 %v349, %v350
    %v352 = vand.u32 %v351, 4294901760
    %353 = vmatpush1.msra.mxu0 %v352
    %354 = vmatprep.subr.mxu0 0.0
    %v355 = vand.u32 %v60, 4294901760
    %v356 = vsub.f32 %v60, %v355
    %v357 = vand.u32 %v356, 4294901760
    %v358 = vsub.f32 %v356, %v357
    %v359 = vand.u32 %v358, 4294901760
    %360 = vmatpush1.msra.mxu0 %v359
    %361 = vmatprep.subr.mxu0 0.0
    %v362 = vand.u32 %v61, 4294901760
    %v363 = vsub.f32 %v61, %v362
    %v364 = vand.u32 %v363, 4294901760
    %v365 = vsub.f32 %v363, %v364
    %v366 = vand.u32 %v365, 4294901760
    %367 = vmatpush1.msra.mxu0 %v366
    %368 = vmatprep.subr.mxu0 0.0
    %v369 = vand.u32 %v62, 4294901760
    %v370 = vsub.f32 %v62, %v369
    %v371 = vand.u32 %v370, 4294901760
    %v372 = vsub.f32 %v370, %v371
    %v373 = vand.u32 %v372, 4294901760
    %374 = vmatpush1.msra.mxu0 %v373
    %375 = vmatprep.subr.mxu0 0.0
    %v376 = vand.u32 %v63, 4294901760
    %v377 = vsub.f32 %v63, %v376
    %v378 = vand.u32 %v377, 4294901760
    %v379 = vsub.f32 %v377, %v378
    %v380 = vand.u32 %v379, 4294901760
    %381 = vmatpush1.msra.mxu0 %v380
    %382 = vmatprep.subr.mxu0 0.0
    %v383 = vand.u32 %v64, 4294901760
    %v384 = vsub.f32 %v64, %v383
    %v385 = vand.u32 %v384, 4294901760
    %v386 = vsub.f32 %v384, %v385
    %v387 = vand.u32 %v386, 4294901760
    %388 = vmatpush1.msra.mxu0 %v387
    %389 = vmatprep.subr.mxu0 0.0
    %v390 = vand.u32 %v65, 4294901760
    %v391 = vsub.f32 %v65, %v390
    %v392 = vand.u32 %v391, 4294901760
    %v393 = vsub.f32 %v391, %v392
    %v394 = vand.u32 %v393, 4294901760
    %395 = vmatpush1.msra.mxu0 %v394
    %396 = vmatprep.subr.mxu0 0.0
    %v397 = vand.u32 %v66, 4294901760
    %v398 = vsub.f32 %v66, %v397
    %v399 = vand.u32 %v398, 4294901760
    %v400 = vsub.f32 %v398, %v399
    %v401 = vand.u32 %v400, 4294901760
    %402 = vmatpush1.msra.mxu0 %v401
    %v403 = vand.u32 %v34, 4294901760
    %404 = vmatprep.mubr.f32.mxu0 %v403
    %v405 = vand.u32 %v32, 4294901760
    %406 = vmatmul.mubr.f32.gmra.mrb[0].mxu0 %v405
    %v407 = vpop.f32.mrb[0].mxu0
    %v408 = vadd.f32 %v176, %v407
    %v409 = vpop.f32.mrb[0].mxu0
    %410 = vdwg.mxu0
    %411 = vmatprep.subr.mxu0 0.0
    %v412 = vand.u32 %v35, 4294901760
    %v413 = vsub.f32 %v35, %v412
    %414 = vmatpush1.msra.mxu0 %v413
    %415 = vmatprep.subr.mxu0 0.0
    %v416 = vand.u32 %v36, 4294901760
    %v417 = vsub.f32 %v36, %v416
    %418 = vmatpush1.msra.mxu0 %v417
    %419 = vmatprep.subr.mxu0 0.0
    %v420 = vand.u32 %v37, 4294901760
    %v421 = vsub.f32 %v37, %v420
    %422 = vmatpush1.msra.mxu0 %v421
    %423 = vmatprep.subr.mxu0 0.0
    %v424 = vand.u32 %v38, 4294901760
    %v425 = vsub.f32 %v38, %v424
    %426 = vmatpush1.msra.mxu0 %v425
    %427 = vmatprep.subr.mxu0 0.0
    %v428 = vand.u32 %v39, 4294901760
    %v429 = vsub.f32 %v39, %v428
    %430 = vmatpush1.msra.mxu0 %v429
    %431 = vmatprep.subr.mxu0 0.0
    %v432 = vand.u32 %v40, 4294901760
    %v433 = vsub.f32 %v40, %v432
    %434 = vmatpush1.msra.mxu0 %v433
    %435 = vmatprep.subr.mxu0 0.0
    %v436 = vand.u32 %v41, 4294901760
    %v437 = vsub.f32 %v41, %v436
    %438 = vmatpush1.msra.mxu0 %v437
    %439 = vmatprep.subr.mxu0 0.0
    %v440 = vand.u32 %v42, 4294901760
    %v441 = vsub.f32 %v42, %v440
    %442 = vmatpush1.msra.mxu0 %v441
    %443 = vmatprep.subr.mxu0 0.0
    %v444 = vand.u32 %v43, 4294901760
    %v445 = vsub.f32 %v43, %v444
    %446 = vmatpush1.msra.mxu0 %v445
    %447 = vmatprep.subr.mxu0 0.0
    %v448 = vand.u32 %v44, 4294901760
    %v449 = vsub.f32 %v44, %v448
    %450 = vmatpush1.msra.mxu0 %v449
    %451 = vmatprep.subr.mxu0 0.0
    %v452 = vand.u32 %v45, 4294901760
    %v453 = vsub.f32 %v45, %v452
    %454 = vmatpush1.msra.mxu0 %v453
    %455 = vmatprep.subr.mxu0 0.0
    %v456 = vand.u32 %v46, 4294901760
    %v457 = vsub.f32 %v46, %v456
    %458 = vmatpush1.msra.mxu0 %v457
    %459 = vmatprep.subr.mxu0 0.0
    %v460 = vand.u32 %v47, 4294901760
    %v461 = vsub.f32 %v47, %v460
    %462 = vmatpush1.msra.mxu0 %v461
    %463 = vmatprep.subr.mxu0 0.0
    %v464 = vand.u32 %v48, 4294901760
    %v465 = vsub.f32 %v48, %v464
    %466 = vmatpush1.msra.mxu0 %v465
    %467 = vmatprep.subr.mxu0 0.0
    %v468 = vand.u32 %v49, 4294901760
    %v469 = vsub.f32 %v49, %v468
    %470 = vmatpush1.msra.mxu0 %v469
    %471 = vmatprep.subr.mxu0 0.0
    %v472 = vand.u32 %v50, 4294901760
    %v473 = vsub.f32 %v50, %v472
    %474 = vmatpush1.msra.mxu0 %v473
    %475 = vmatprep.subr.mxu0 0.0
    %v476 = vand.u32 %v51, 4294901760
    %v477 = vsub.f32 %v51, %v476
    %478 = vmatpush1.msra.mxu0 %v477
    %479 = vmatprep.subr.mxu0 0.0
    %v480 = vand.u32 %v52, 4294901760
    %v481 = vsub.f32 %v52, %v480
    %482 = vmatpush1.msra.mxu0 %v481
    %483 = vmatprep.subr.mxu0 0.0
    %v484 = vand.u32 %v53, 4294901760
    %v485 = vsub.f32 %v53, %v484
    %486 = vmatpush1.msra.mxu0 %v485
    %487 = vmatprep.subr.mxu0 0.0
    %v488 = vand.u32 %v54, 4294901760
    %v489 = vsub.f32 %v54, %v488
    %490 = vmatpush1.msra.mxu0 %v489
    %491 = vmatprep.subr.mxu0 0.0
    %v492 = vand.u32 %v55, 4294901760
    %v493 = vsub.f32 %v55, %v492
    %494 = vmatpush1.msra.mxu0 %v493
    %495 = vmatprep.subr.mxu0 0.0
    %v496 = vand.u32 %v56, 4294901760
    %v497 = vsub.f32 %v56, %v496
    %498 = vmatpush1.msra.mxu0 %v497
    %499 = vmatprep.subr.mxu0 0.0
    %v500 = vand.u32 %v57, 4294901760
    %v501 = vsub.f32 %v57, %v500
    %502 = vmatpush1.msra.mxu0 %v501
    %503 = vmatprep.subr.mxu0 0.0
    %v504 = vand.u32 %v58, 4294901760
    %v505 = vsub.f32 %v58, %v504
    %506 = vmatpush1.msra.mxu0 %v505
    %507 = vmatprep.subr.mxu0 0.0
    %v508 = vand.u32 %v59, 4294901760
    %v509 = vsub.f32 %v59, %v508
    %510 = vmatpush1.msra.mxu0 %v509
    %511 = vmatprep.subr.mxu0 0.0
    %v512 = vand.u32 %v60, 4294901760
    %v513 = vsub.f32 %v60, %v512
    %514 = vmatpush1.msra.mxu0 %v513
    %515 = vmatprep.subr.mxu0 0.0
    %v516 = vand.u32 %v61, 4294901760
    %v517 = vsub.f32 %v61, %v516
    %518 = vmatpush1.msra.mxu0 %v517
    %519 = vmatprep.subr.mxu0 0.0
    %v520 = vand.u32 %v62, 4294901760
    %v521 = vsub.f32 %v62, %v520
    %522 = vmatpush1.msra.mxu0 %v521
    %523 = vmatprep.subr.mxu0 0.0
    %v524 = vand.u32 %v63, 4294901760
    %v525 = vsub.f32 %v63, %v524
    %526 = vmatpush1.msra.mxu0 %v525
    %527 = vmatprep.subr.mxu0 0.0
    %v528 = vand.u32 %v64, 4294901760
    %v529 = vsub.f32 %v64, %v528
    %530 = vmatpush1.msra.mxu0 %v529
    %531 = vmatprep.subr.mxu0 0.0
    %v532 = vand.u32 %v65, 4294901760
    %v533 = vsub.f32 %v65, %v532
    %534 = vmatpush1.msra.mxu0 %v533
    %535 = vmatprep.subr.mxu0 0.0
    %v536 = vand.u32 %v66, 4294901760
    %v537 = vsub.f32 %v66, %v536
    %538 = vmatpush1.msra.mxu0 %v537
    %v539 = vand.u32 %v34, 4294901760
    %v540 = vsub.f32 %v34, %v539
    %541 = vmatprep.mubr.f32.mxu0 %v540
    %v542 = vand.u32 %v32, 4294901760
    %v543 = vsub.f32 %v32, %v542
    %544 = vmatmul.mubr.f32.gmra.mrb[0].mxu0 %v543
    %v545 = vpop.f32.mrb[0].mxu0
    %v546 = vadd.f32 %v408, %v545
    %v547 = vpop.f32.mrb[0].mxu0
    %548 = vdwg.mxu0
    %549 = vmatprep.subr.mxu0 0.0
    %v550 = vand.u32 %v35, 4294901760
    %551 = vmatpush1.msra.mxu0 %v550
    %552 = vmatprep.subr.mxu0 0.0
    %v553 = vand.u32 %v36, 4294901760
    %554 = vmatpush1.msra.mxu0 %v553
    %555 = vmatprep.subr.mxu0 0.0
    %v556 = vand.u32 %v37, 4294901760
    %557 = vmatpush1.msra.mxu0 %v556
    %558 = vmatprep.subr.mxu0 0.0
    %v559 = vand.u32 %v38, 4294901760
    %560 = vmatpush1.msra.mxu0 %v559
    %561 = vmatprep.subr.mxu0 0.0
    %v562 = vand.u32 %v39, 4294901760
    %563 = vmatpush1.msra.mxu0 %v562
    %564 = vmatprep.subr.mxu0 0.0
    %v565 = vand.u32 %v40, 4294901760
    %566 = vmatpush1.msra.mxu0 %v565
    %567 = vmatprep.subr.mxu0 0.0
    %v568 = vand.u32 %v41, 4294901760
    %569 = vmatpush1.msra.mxu0 %v568
    %570 = vmatprep.subr.mxu0 0.0
    %v571 = vand.u32 %v42, 4294901760
    %572 = vmatpush1.msra.mxu0 %v571
    %573 = vmatprep.subr.mxu0 0.0
    %v574 = vand.u32 %v43, 4294901760
    %575 = vmatpush1.msra.mxu0 %v574
    %576 = vmatprep.subr.mxu0 0.0
    %v577 = vand.u32 %v44, 4294901760
    %578 = vmatpush1.msra.mxu0 %v577
    %579 = vmatprep.subr.mxu0 0.0
    %v580 = vand.u32 %v45, 4294901760
    %581 = vmatpush1.msra.mxu0 %v580
    %582 = vmatprep.subr.mxu0 0.0
    %v583 = vand.u32 %v46, 4294901760
    %584 = vmatpush1.msra.mxu0 %v583
    %585 = vmatprep.subr.mxu0 0.0
    %v586 = vand.u32 %v47, 4294901760
    %587 = vmatpush1.msra.mxu0 %v586
    %588 = vmatprep.subr.mxu0 0.0
    %v589 = vand.u32 %v48, 4294901760
    %590 = vmatpush1.msra.mxu0 %v589
    %591 = vmatprep.subr.mxu0 0.0
    %v592 = vand.u32 %v49, 4294901760
    %593 = vmatpush1.msra.mxu0 %v592
    %594 = vmatprep.subr.mxu0 0.0
    %v595 = vand.u32 %v50, 4294901760
    %596 = vmatpush1.msra.mxu0 %v595
    %597 = vmatprep.subr.mxu0 0.0
    %v598 = vand.u32 %v51, 4294901760
    %599 = vmatpush1.msra.mxu0 %v598
    %600 = vmatprep.subr.mxu0 0.0
    %v601 = vand.u32 %v52, 4294901760
    %602 = vmatpush1.msra.mxu0 %v601
    %603 = vmatprep.subr.mxu0 0.0
    %v604 = vand.u32 %v53, 4294901760
    %605 = vmatpush1.msra.mxu0 %v604
    %606 = vmatprep.subr.mxu0 0.0
    %v607 = vand.u32 %v54, 4294901760
    %608 = vmatpush1.msra.mxu0 %v607
    %609 = vmatprep.subr.mxu0 0.0
    %v610 = vand.u32 %v55, 4294901760
    %611 = vmatpush1.msra.mxu0 %v610
    %612 = vmatprep.subr.mxu0 0.0
    %v613 = vand.u32 %v56, 4294901760
    %614 = vmatpush1.msra.mxu0 %v613
    %615 = vmatprep.subr.mxu0 0.0
    %v616 = vand.u32 %v57, 4294901760
    %617 = vmatpush1.msra.mxu0 %v616
    %618 = vmatprep.subr.mxu0 0.0
    %v619 = vand.u32 %v58, 4294901760
    %620 = vmatpush1.msra.mxu0 %v619
    %621 = vmatprep.subr.mxu0 0.0
    %v622 = vand.u32 %v59, 4294901760
    %623 = vmatpush1.msra.mxu0 %v622
    %624 = vmatprep.subr.mxu0 0.0
    %v625 = vand.u32 %v60, 4294901760
    %626 = vmatpush1.msra.mxu0 %v625
    %627 = vmatprep.subr.mxu0 0.0
    %v628 = vand.u32 %v61, 4294901760
    %629 = vmatpush1.msra.mxu0 %v628
    %630 = vmatprep.subr.mxu0 0.0
    %v631 = vand.u32 %v62, 4294901760
    %632 = vmatpush1.msra.mxu0 %v631
    %633 = vmatprep.subr.mxu0 0.0
    %v634 = vand.u32 %v63, 4294901760
    %635 = vmatpush1.msra.mxu0 %v634
    %636 = vmatprep.subr.mxu0 0.0
    %v637 = vand.u32 %v64, 4294901760
    %638 = vmatpush1.msra.mxu0 %v637
    %639 = vmatprep.subr.mxu0 0.0
    %v640 = vand.u32 %v65, 4294901760
    %641 = vmatpush1.msra.mxu0 %v640
    %642 = vmatprep.subr.mxu0 0.0
    %v643 = vand.u32 %v66, 4294901760
    %644 = vmatpush1.msra.mxu0 %v643
    %v645 = vand.u32 %v34, 4294901760
    %v646 = vsub.f32 %v34, %v645
    %v647 = vand.u32 %v646, 4294901760
    %648 = vmatprep.mubr.f32.mxu0 %v647
    %v649 = vand.u32 %v32, 4294901760
    %v650 = vsub.f32 %v32, %v649
    %v651 = vand.u32 %v650, 4294901760
    %652 = vmatmul.mubr.f32.gmra.mrb[0].mxu0 %v651
    %v653 = vpop.f32.mrb[0].mxu0
    %v654 = vadd.f32 %v546, %v653
    %v655 = vpop.f32.mrb[0].mxu0
    %656 = vdwg.mxu0
    %657 = vmatprep.subr.mxu0 0.0
    %v658 = vand.u32 %v35, 4294901760
    %v659 = vsub.f32 %v35, %v658
    %v660 = vand.u32 %v659, 4294901760
    %661 = vmatpush1.msra.mxu0 %v660
    %662 = vmatprep.subr.mxu0 0.0
    %v663 = vand.u32 %v36, 4294901760
    %v664 = vsub.f32 %v36, %v663
    %v665 = vand.u32 %v664, 4294901760
    %666 = vmatpush1.msra.mxu0 %v665
    %667 = vmatprep.subr.mxu0 0.0
    %v668 = vand.u32 %v37, 4294901760
    %v669 = vsub.f32 %v37, %v668
    %v670 = vand.u32 %v669, 4294901760
    %671 = vmatpush1.msra.mxu0 %v670
    %672 = vmatprep.subr.mxu0 0.0
    %v673 = vand.u32 %v38, 4294901760
    %v674 = vsub.f32 %v38, %v673
    %v675 = vand.u32 %v674, 4294901760
    %676 = vmatpush1.msra.mxu0 %v675
    %677 = vmatprep.subr.mxu0 0.0
    %v678 = vand.u32 %v39, 4294901760
    %v679 = vsub.f32 %v39, %v678
    %v680 = vand.u32 %v679, 4294901760
    %681 = vmatpush1.msra.mxu0 %v680
    %682 = vmatprep.subr.mxu0 0.0
    %v683 = vand.u32 %v40, 4294901760
    %v684 = vsub.f32 %v40, %v683
    %v685 = vand.u32 %v684, 4294901760
    %686 = vmatpush1.msra.mxu0 %v685
    %687 = vmatprep.subr.mxu0 0.0
    %v688 = vand.u32 %v41, 4294901760
    %v689 = vsub.f32 %v41, %v688
    %v690 = vand.u32 %v689, 4294901760
    %691 = vmatpush1.msra.mxu0 %v690
    %692 = vmatprep.subr.mxu0 0.0
    %v693 = vand.u32 %v42, 4294901760
    %v694 = vsub.f32 %v42, %v693
    %v695 = vand.u32 %v694, 4294901760
    %696 = vmatpush1.msra.mxu0 %v695
    %697 = vmatprep.subr.mxu0 0.0
    %v698 = vand.u32 %v43, 4294901760
    %v699 = vsub.f32 %v43, %v698
    %v700 = vand.u32 %v699, 4294901760
    %701 = vmatpush1.msra.mxu0 %v700
    %702 = vmatprep.subr.mxu0 0.0
    %v703 = vand.u32 %v44, 4294901760
    %v704 = vsub.f32 %v44, %v703
    %v705 = vand.u32 %v704, 4294901760
    %706 = vmatpush1.msra.mxu0 %v705
    %707 = vmatprep.subr.mxu0 0.0
    %v708 = vand.u32 %v45, 4294901760
    %v709 = vsub.f32 %v45, %v708
    %v710 = vand.u32 %v709, 4294901760
    %711 = vmatpush1.msra.mxu0 %v710
    %712 = vmatprep.subr.mxu0 0.0
    %v713 = vand.u32 %v46, 4294901760
    %v714 = vsub.f32 %v46, %v713
    %v715 = vand.u32 %v714, 4294901760
    %716 = vmatpush1.msra.mxu0 %v715
    %717 = vmatprep.subr.mxu0 0.0
    %v718 = vand.u32 %v47, 4294901760
    %v719 = vsub.f32 %v47, %v718
    %v720 = vand.u32 %v719, 4294901760
    %721 = vmatpush1.msra.mxu0 %v720
    %722 = vmatprep.subr.mxu0 0.0
    %v723 = vand.u32 %v48, 4294901760
    %v724 = vsub.f32 %v48, %v723
    %v725 = vand.u32 %v724, 4294901760
    %726 = vmatpush1.msra.mxu0 %v725
    %727 = vmatprep.subr.mxu0 0.0
    %v728 = vand.u32 %v49, 4294901760
    %v729 = vsub.f32 %v49, %v728
    %v730 = vand.u32 %v729, 4294901760
    %731 = vmatpush1.msra.mxu0 %v730
    %732 = vmatprep.subr.mxu0 0.0
    %v733 = vand.u32 %v50, 4294901760
    %v734 = vsub.f32 %v50, %v733
    %v735 = vand.u32 %v734, 4294901760
    %736 = vmatpush1.msra.mxu0 %v735
    %737 = vmatprep.subr.mxu0 0.0
    %v738 = vand.u32 %v51, 4294901760
    %v739 = vsub.f32 %v51, %v738
    %v740 = vand.u32 %v739, 4294901760
    %741 = vmatpush1.msra.mxu0 %v740
    %742 = vmatprep.subr.mxu0 0.0
    %v743 = vand.u32 %v52, 4294901760
    %v744 = vsub.f32 %v52, %v743
    %v745 = vand.u32 %v744, 4294901760
    %746 = vmatpush1.msra.mxu0 %v745
    %747 = vmatprep.subr.mxu0 0.0
    %v748 = vand.u32 %v53, 4294901760
    %v749 = vsub.f32 %v53, %v748
    %v750 = vand.u32 %v749, 4294901760
    %751 = vmatpush1.msra.mxu0 %v750
    %752 = vmatprep.subr.mxu0 0.0
    %v753 = vand.u32 %v54, 4294901760
    %v754 = vsub.f32 %v54, %v753
    %v755 = vand.u32 %v754, 4294901760
    %756 = vmatpush1.msra.mxu0 %v755
    %757 = vmatprep.subr.mxu0 0.0
    %v758 = vand.u32 %v55, 4294901760
    %v759 = vsub.f32 %v55, %v758
    %v760 = vand.u32 %v759, 4294901760
    %761 = vmatpush1.msra.mxu0 %v760
    %762 = vmatprep.subr.mxu0 0.0
    %v763 = vand.u32 %v56, 4294901760
    %v764 = vsub.f32 %v56, %v763
    %v765 = vand.u32 %v764, 4294901760
    %766 = vmatpush1.msra.mxu0 %v765
    %767 = vmatprep.subr.mxu0 0.0
    %v768 = vand.u32 %v57, 4294901760
    %v769 = vsub.f32 %v57, %v768
    %v770 = vand.u32 %v769, 4294901760
    %771 = vmatpush1.msra.mxu0 %v770
    %772 = vmatprep.subr.mxu0 0.0
    %v773 = vand.u32 %v58, 4294901760
    %v774 = vsub.f32 %v58, %v773
    %v775 = vand.u32 %v774, 4294901760
    %776 = vmatpush1.msra.mxu0 %v775
    %777 = vmatprep.subr.mxu0 0.0
    %v778 = vand.u32 %v59, 4294901760
    %v779 = vsub.f32 %v59, %v778
    %v780 = vand.u32 %v779, 4294901760
    %781 = vmatpush1.msra.mxu0 %v780
    %782 = vmatprep.subr.mxu0 0.0
    %v783 = vand.u32 %v60, 4294901760
    %v784 = vsub.f32 %v60, %v783
    %v785 = vand.u32 %v784, 4294901760
    %786 = vmatpush1.msra.mxu0 %v785
    %787 = vmatprep.subr.mxu0 0.0
    %v788 = vand.u32 %v61, 4294901760
    %v789 = vsub.f32 %v61, %v788
    %v790 = vand.u32 %v789, 4294901760
    %791 = vmatpush1.msra.mxu0 %v790
    %792 = vmatprep.subr.mxu0 0.0
    %v793 = vand.u32 %v62, 4294901760
    %v794 = vsub.f32 %v62, %v793
    %v795 = vand.u32 %v794, 4294901760
    %796 = vmatpush1.msra.mxu0 %v795
    %797 = vmatprep.subr.mxu0 0.0
    %v798 = vand.u32 %v63, 4294901760
    %v799 = vsub.f32 %v63, %v798
    %v800 = vand.u32 %v799, 4294901760
    %801 = vmatpush1.msra.mxu0 %v800
    %802 = vmatprep.subr.mxu0 0.0
    %v803 = vand.u32 %v64, 4294901760
    %v804 = vsub.f32 %v64, %v803
    %v805 = vand.u32 %v804, 4294901760
    %806 = vmatpush1.msra.mxu0 %v805
    %807 = vmatprep.subr.mxu0 0.0
    %v808 = vand.u32 %v65, 4294901760
    %v809 = vsub.f32 %v65, %v808
    %v810 = vand.u32 %v809, 4294901760
    %811 = vmatpush1.msra.mxu0 %v810
    %812 = vmatprep.subr.mxu0 0.0
    %v813 = vand.u32 %v66, 4294901760
    %v814 = vsub.f32 %v66, %v813
    %v815 = vand.u32 %v814, 4294901760
    %816 = vmatpush1.msra.mxu0 %v815
    %v817 = vand.u32 %v34, 4294901760
    %818 = vmatprep.mubr.f32.mxu0 %v817
    %v819 = vand.u32 %v32, 4294901760
    %820 = vmatmul.mubr.f32.gmra.mrb[0].mxu0 %v819
    %v821 = vpop.f32.mrb[0].mxu0
    %v822 = vadd.f32 %v654, %v821
    %v823 = vpop.f32.mrb[0].mxu0
    %824 = vdwg.mxu0
    %825 = vmatprep.subr.mxu0 0.0
    %v826 = vand.u32 %v35, 4294901760
    %827 = vmatpush1.msra.mxu0 %v826
    %828 = vmatprep.subr.mxu0 0.0
    %v829 = vand.u32 %v36, 4294901760
    %830 = vmatpush1.msra.mxu0 %v829
    %831 = vmatprep.subr.mxu0 0.0
    %v832 = vand.u32 %v37, 4294901760
    %833 = vmatpush1.msra.mxu0 %v832
    %834 = vmatprep.subr.mxu0 0.0
    %v835 = vand.u32 %v38, 4294901760
    %836 = vmatpush1.msra.mxu0 %v835
    %837 = vmatprep.subr.mxu0 0.0
    %v838 = vand.u32 %v39, 4294901760
    %839 = vmatpush1.msra.mxu0 %v838
    %840 = vmatprep.subr.mxu0 0.0
    %v841 = vand.u32 %v40, 4294901760
    %842 = vmatpush1.msra.mxu0 %v841
    %843 = vmatprep.subr.mxu0 0.0
    %v844 = vand.u32 %v41, 4294901760
    %845 = vmatpush1.msra.mxu0 %v844
    %846 = vmatprep.subr.mxu0 0.0
    %v847 = vand.u32 %v42, 4294901760
    %848 = vmatpush1.msra.mxu0 %v847
    %849 = vmatprep.subr.mxu0 0.0
    %v850 = vand.u32 %v43, 4294901760
    %851 = vmatpush1.msra.mxu0 %v850
    %852 = vmatprep.subr.mxu0 0.0
    %v853 = vand.u32 %v44, 4294901760
    %854 = vmatpush1.msra.mxu0 %v853
    %855 = vmatprep.subr.mxu0 0.0
    %v856 = vand.u32 %v45, 4294901760
    %857 = vmatpush1.msra.mxu0 %v856
    %858 = vmatprep.subr.mxu0 0.0
    %v859 = vand.u32 %v46, 4294901760
    %860 = vmatpush1.msra.mxu0 %v859
    %861 = vmatprep.subr.mxu0 0.0
    %v862 = vand.u32 %v47, 4294901760
    %863 = vmatpush1.msra.mxu0 %v862
    %864 = vmatprep.subr.mxu0 0.0
    %v865 = vand.u32 %v48, 4294901760
    %866 = vmatpush1.msra.mxu0 %v865
    %867 = vmatprep.subr.mxu0 0.0
    %v868 = vand.u32 %v49, 4294901760
    %869 = vmatpush1.msra.mxu0 %v868
    %870 = vmatprep.subr.mxu0 0.0
    %v871 = vand.u32 %v50, 4294901760
    %872 = vmatpush1.msra.mxu0 %v871
    %873 = vmatprep.subr.mxu0 0.0
    %v874 = vand.u32 %v51, 4294901760
    %875 = vmatpush1.msra.mxu0 %v874
    %876 = vmatprep.subr.mxu0 0.0
    %v877 = vand.u32 %v52, 4294901760
    %878 = vmatpush1.msra.mxu0 %v877
    %879 = vmatprep.subr.mxu0 0.0
    %v880 = vand.u32 %v53, 4294901760
    %881 = vmatpush1.msra.mxu0 %v880
    %882 = vmatprep.subr.mxu0 0.0
    %v883 = vand.u32 %v54, 4294901760
    %884 = vmatpush1.msra.mxu0 %v883
    %885 = vmatprep.subr.mxu0 0.0
    %v886 = vand.u32 %v55, 4294901760
    %887 = vmatpush1.msra.mxu0 %v886
    %888 = vmatprep.subr.mxu0 0.0
    %v889 = vand.u32 %v56, 4294901760
    %890 = vmatpush1.msra.mxu0 %v889
    %891 = vmatprep.subr.mxu0 0.0
    %v892 = vand.u32 %v57, 4294901760
    %893 = vmatpush1.msra.mxu0 %v892
    %894 = vmatprep.subr.mxu0 0.0
    %v895 = vand.u32 %v58, 4294901760
    %896 = vmatpush1.msra.mxu0 %v895
    %897 = vmatprep.subr.mxu0 0.0
    %v898 = vand.u32 %v59, 4294901760
    %899 = vmatpush1.msra.mxu0 %v898
    %900 = vmatprep.subr.mxu0 0.0
    %v901 = vand.u32 %v60, 4294901760
    %902 = vmatpush1.msra.mxu0 %v901
    %903 = vmatprep.subr.mxu0 0.0
    %v904 = vand.u32 %v61, 4294901760
    %905 = vmatpush1.msra.mxu0 %v904
    %906 = vmatprep.subr.mxu0 0.0
    %v907 = vand.u32 %v62, 4294901760
    %908 = vmatpush1.msra.mxu0 %v907
    %909 = vmatprep.subr.mxu0 0.0
    %v910 = vand.u32 %v63, 4294901760
    %911 = vmatpush1.msra.mxu0 %v910
    %912 = vmatprep.subr.mxu0 0.0
    %v913 = vand.u32 %v64, 4294901760
    %914 = vmatpush1.msra.mxu0 %v913
    %915 = vmatprep.subr.mxu0 0.0
    %v916 = vand.u32 %v65, 4294901760
    %917 = vmatpush1.msra.mxu0 %v916
    %918 = vmatprep.subr.mxu0 0.0
    %v919 = vand.u32 %v66, 4294901760
    %920 = vmatpush1.msra.mxu0 %v919
    %v921 = vand.u32 %v34, 4294901760
    %922 = vmatprep.mubr.f32.mxu0 %v921
    %v923 = vand.u32 %v32, 4294901760
    %924 = vmatmul.mubr.f32.gmra.mrb[0].mxu0 %v923
    %v925 = vpop.f32.mrb[0].mxu0
    %v926 = vadd.f32 %v822, %v925
    %v927 = vpop.f32.mrb[0].mxu0
    %928 = vdwg.mxu0
    %v929 = vlog2.pop %v926
    %v930 = vmul.f32 %v929, 0.6931472
    %v931 = vstv %s19
    %v932 = vmul.f32 %v931, %v930
    %v933 = vmul.f32 %v932, 1.442695
    %v934 = vpow.pop %v933
    %vm935 = vcmask 130048
    %936 = vst.msk [vmem:[#allocation3] sm:$0xff] %vm935, %v934
    // Predicated region
    $region14: #{tpu_custom_call.1} parent=1 // pred_check
      _
    $region15: #{tpu_custom_call.1} parent=1 // pred_check_branch
      %938 = sbr.rel (0) target = $region17
    $region16: #{tpu_custom_call.1} parent=1 // pred_region
      %s940 = ssub.s32 128, 128
      %941 = vsyncadd [#allocation4], %s940
      %s943 = sshll.u32 [#allocation3], 4
      %s944 = int_to_ptr.vmem [resolvable:$true] %s943
      %946 = dma.vmem_to_hbm [thread:$0]  %s944, 128, %s3, [#allocation4]
    $region17: #{tpu_custom_call.1} parent=1 // pred_fallthru
      _
    // Predicated region
    $region18: #{tpu_custom_call.1} parent=1 // pred_check
      _
    $region19: #{tpu_custom_call.1} parent=1 // pred_check_branch
      %948 = sbr.rel (0) target = $region21
    $region20: #{tpu_custom_call.1} parent=1 // pred_region
      %949 = dma.done [#allocation4], 128
    $region21: #{tpu_custom_call.1} parent=1 // pred_fallthru
      _
    %950 = vsyncpa [#allocation4], 1

</llo_original>
